<compile_context>
chip_gen: v7x
topology: tpu7x:2x2x1
jax: 0.10.0
libtpu: 0.0.40
codegen_flags: <defaults>
</compile_context>

<pallas_src>
import jax
import jax.numpy as jnp
from jax.experimental import pallas as pl
from jax.experimental.pallas import tpu as pltpu


HIDDEN = 64            # hidden width of the PyTorch module
LANE = 128             # TPU lane width (hidden dim padded to this)
TB_MAX = 2048          # max batch-tile rows (VMEM-safe on all generations)
SMALL_BATCH = 128      # below this, plain jnp beats a kernel launch


def _round_up(n: int, m: int) -> int:
    return ((n + m - 1) // m) * m


def _cdiv(a: int, b: int) -> int:
    return (a + b - 1) // b


def pi_forward_kernel(x_ref, w1_ref, b1_ref, w2_ref, b2_ref, o_ref):
    """One batch tile of the MLP: relu(x @ W1 + b1) @ W2 + b2.

    x_ref : (TB, in_dim)        bf16 (batch-tiled)
    w1_ref: (in_dim, H_PAD)     bf16 (resident: same block every step)
    b1_ref: (1, H_PAD)          f32  (resident)
    w2_ref: (H_PAD, out_dim)    bf16 (resident)
    b2_ref: (1, out_dim)        f32  (resident)
    o_ref : (TB, out_dim)       f32  (batch-tiled, narrow masked store)
    """
    # First layer: bf16 MXU matmul with f32 accumulation.
    h = jnp.dot(x_ref[...], w1_ref[...], preferred_element_type=jnp.float32)
    # Bias + ReLU kept in f32 on the VPU (no bf16 elementwise on v5e).
    h = jnp.maximum(h + b1_ref[...], 0.0)
    # Second layer: cast activations to bf16 for the MXU, accumulate in f32.
    out = jnp.dot(h.astype(w2_ref.dtype), w2_ref[...],
                  preferred_element_type=jnp.float32)
    o_ref[...] = out + b2_ref[...]


def prepare_pi_params(w1, b1, w2, b2, compute_dtype=jnp.bfloat16):
    """One-time prep: pad hidden dim to 128 lanes and cast weights to bf16.

    Done once at init time; the returned arrays are the stored parameter
    format, so the forward pass never re-pads / re-casts per call.
    Padded hidden columns/rows are exactly zero and cannot leak into outputs.
    """
    in_dim, hidden = w1.shape
    hidden2, out_dim = w2.shape
    assert hidden == hidden2
    h_pad = _round_up(hidden, LANE)

    w1p = jnp.zeros((in_dim, h_pad), compute_dtype).at[:, :hidden].set(
        w1.astype(compute_dtype))
    b1p = jnp.zeros((1, h_pad), jnp.float32).at[:, :hidden].set(
        jnp.reshape(b1, (1, hidden)).astype(jnp.float32))
    w2p = jnp.zeros((h_pad, out_dim), compute_dtype).at[:hidden, :].set(
        w2.astype(compute_dtype))
    b2p = jnp.reshape(b2, (1, out_dim)).astype(jnp.float32)
    return w1p, b1p, w2p, b2p


@jax.jit
def pi_forward_pallas(x, w1p, b1p, w2p, b2p):
    """pdparam = relu(x @ W1 + b1) @ W2 + b2 via a single Pallas kernel.

    x   : (B, in_dim) float32 (or bf16)
    w1p : (in_dim, H_PAD) bf16, b1p: (1, H_PAD) f32
    w2p : (H_PAD, out_dim) bf16, b2p: (1, out_dim) f32
    Returns (B, out_dim) float32 logits.
    """
    batch, in_dim = x.shape
    h_pad, out_dim = w2p.shape
    assert w1p.shape == (in_dim, h_pad)

    # ---- Batch tiling: even split, >= 2 tiles for large batches (v7x TCs) --
    n_tiles = max(1, _cdiv(batch, TB_MAX))
    if batch >= 512:
        n_tiles = max(n_tiles, 2)
    tb = _round_up(max(_cdiv(batch, n_tiles), 8), 8)
    b_padded = n_tiles * tb

    xp = x.astype(w1p.dtype)
    if b_padded != batch:
        xp = jnp.pad(xp, ((0, b_padded - batch), (0, 0)))

    itemsize = jnp.dtype(w1p.dtype).itemsize

    # ---- VMEM budget: double-buffered x / out tiles + resident weights -----
    vmem_need = (2 * tb * in_dim * itemsize           # x (double-buffered)
                 + 2 * tb * out_dim * 4               # out (double-buffered)
                 + 2 * (w1p.size * itemsize + w2p.size * itemsize
                        + b1p.size * 4 + b2p.size * 4))
    vmem_limit = int(min(max(2 * vmem_need + (4 << 20), 8 << 20), 32 << 20))

    cost = pl.CostEstimate(
        flops=2 * batch * (in_dim * h_pad + h_pad * out_dim),
        transcendentals=0,
        bytes_accessed=(xp.size * itemsize
                        + w1p.size * itemsize + w2p.size * itemsize
                        + b1p.size * 4 + b2p.size * 4
                        + b_padded * out_dim * 4),
    )

    out = pl.pallas_call(
        pi_forward_kernel,
        out_shape=jax.ShapeDtypeStruct((b_padded, out_dim), jnp.float32),
        grid_spec=pltpu.PrefetchScalarGridSpec(
            num_scalar_prefetch=0,
            grid=(n_tiles,),
            in_specs=[
                # x: tiled along batch, full (small) feature dim.
                pl.BlockSpec((tb, in_dim), lambda i: (i, 0)),
                # Weights / biases: resident (same block every grid step).
                pl.BlockSpec((in_dim, h_pad), lambda i: (0, 0)),
                pl.BlockSpec((1, h_pad), lambda i: (0, 0)),
                pl.BlockSpec((h_pad, out_dim), lambda i: (0, 0)),
                pl.BlockSpec((1, out_dim), lambda i: (0, 0)),
            ],
            # Narrow output block: last dim == full array dim (masked store),
            # ~64x less writeback than a 128-lane padded slab for out_dim=2.
            out_specs=pl.BlockSpec((tb, out_dim), lambda i: (i, 0)),
        ),
        compiler_params=pltpu.CompilerParams(
            # Batch axis is embarrassingly parallel -> megacore on v7x.
            dimension_semantics=("parallel",),
            vmem_limit_bytes=vmem_limit,
        ),
        cost_estimate=cost,
    )(xp, w1p, b1p, w2p, b2p)

    if b_padded != batch:
        out = out[:batch]
    return out


@jax.jit
def _pi_forward_jnp(x, w1p, b1p, w2p, b2p):
    """Plain-JAX forward with identical bf16-in / f32-accumulate semantics."""
    xb = x.astype(w1p.dtype)
    h = jnp.maximum(
        jnp.dot(xb, w1p, preferred_element_type=jnp.float32) + b1p, 0.0)
    return jnp.dot(h.astype(w2p.dtype), w2p,
                   preferred_element_type=jnp.float32) + b2p


def pi_forward(x, params):
    """Dispatcher: tiny batches (acting) skip the kernel launch entirely."""
    w1p, b1p, w2p, b2p = params
    if x.shape[0] < SMALL_BATCH:
        return _pi_forward_jnp(x, w1p, b1p, w2p, b2p)
    return pi_forward_pallas(x, w1p, b1p, w2p, b2p)


def init_pi_params(key, in_dim, out_dim):
    """nn.Linear-style uniform(-1/sqrt(fan_in), 1/sqrt(fan_in)) init."""
    k1, k2, k3, k4 = jax.random.split(key, 4)
    bound1 = 1.0 / jnp.sqrt(jnp.float32(in_dim))
    bound2 = 1.0 / jnp.sqrt(jnp.float32(HIDDEN))
    # Stored as [in_features, out_features] (transpose of PyTorch layout).
    w1 = jax.random.uniform(k1, (in_dim, HIDDEN), jnp.float32, -bound1, bound1)
    b1 = jax.random.uniform(k2, (1, HIDDEN), jnp.float32, -bound1, bound1)
    w2 = jax.random.uniform(k3, (HIDDEN, out_dim), jnp.float32, -bound2, bound2)
    b2 = jax.random.uniform(k4, (1, out_dim), jnp.float32, -bound2, bound2)
    return w1, b1, w2, b2


if __name__ == "__main__":
    # Small shapes consistent with a policy-gradient setup (CartPole-like):
    # 4 state features, 2 discrete actions.
    in_dim, out_dim = 4, 2

    key = jax.random.PRNGKey(0)
    kx, kx2, kp = jax.random.split(key, 3)
    w1, b1, w2, b2 = init_pi_params(kp, in_dim, out_dim)
    params = prepare_pi_params(w1, b1, w2, b2)   # one-time pad + bf16 cast

    def ref_matched(x):
        # Identical bf16-input / f32-accumulate math in plain JAX (f32 params).
        xb = x.astype(jnp.bfloat16)
        h = jnp.maximum(
            jnp.dot(xb, w1.astype(jnp.bfloat16),
                    preferred_element_type=jnp.float32) + b1, 0.0)
        return jnp.dot(h.astype(jnp.bfloat16), w2.astype(jnp.bfloat16),
                       preferred_element_type=jnp.float32) + b2

    # --- Case 1: tiny acting batch, exercise the Pallas kernel directly. ----
    batch = 8
    x = jax.random.normal(kx, (batch, in_dim), jnp.float32)
    pdparam = jax.block_until_ready(pi_forward_pallas(x, *params))
    assert pdparam.shape == (batch, out_dim)
    assert jnp.allclose(pdparam, ref_matched(x), atol=1e-3, rtol=1e-3)
    # Full-f32 semantics sanity check (looser: bf16 inputs).
    ref_f32 = jnp.maximum(x @ w1 + b1, 0.0) @ w2 + b2
    assert jnp.allclose(pdparam, ref_f32, atol=5e-2, rtol=5e-2)
    # Dispatcher takes the jnp path here but must agree numerically.
    pd_disp = jax.block_until_ready(pi_forward(x, params))
    assert jnp.allclose(pdparam, pd_disp, atol=1e-3, rtol=1e-3)

    # --- Case 2: training-style batch, exercises >=2 tiles + row padding. ---
    batch2 = 520
    x2 = jax.random.normal(kx2, (batch2, in_dim), jnp.float32)
    pdparam2 = jax.block_until_ready(pi_forward(x2, params))   # Pallas path
    assert pdparam2.shape == (batch2, out_dim)
    assert jnp.allclose(pdparam2, ref_matched(x2), atol=1e-3, rtol=1e-3)

    # TODO(synk): act()'s Categorical sampling / log_prob bookkeeping is
    # host-side policy glue in the original module (not part of forward());
    # do softmax/sample in plain JAX on `pdparam` if needed.
    print("KERNEL_OK")
</pallas_src>

<mosaic_0001>
module attributes {stable_mosaic.version = 11 : i64} {
  func.func @pi_forward_kernel(%arg0: i32, %arg1: memref<8x4xbf16, #tpu.memory_space<vmem>>, %arg2: memref<4x128xbf16, #tpu.memory_space<vmem>>, %arg3: memref<1x128xf32, #tpu.memory_space<vmem>>, %arg4: memref<128x2xbf16, #tpu.memory_space<vmem>>, %arg5: memref<1x2xf32, #tpu.memory_space<vmem>>, %arg6: memref<8x2xf32, #tpu.memory_space<vmem>>) attributes {dimension_semantics = [#tpu.dimension_semantics<parallel>], iteration_bounds = array<i64: 1>, scalar_prefetch = 0 : i64, scratch_operands = 0 : i64, tpu.core_type = #tpu.core_type<tc>, window_params = [{transform_indices = @transform_0, window_bounds = array<i64: 8, 4>}, {pipeline_mode = #tpu.pipeline_mode<synchronous>, transform_indices = @transform_1, window_bounds = array<i64: 4, 128>}, {pipeline_mode = #tpu.pipeline_mode<synchronous>, transform_indices = @transform_2, window_bounds = array<i64: 1, 128>}, {pipeline_mode = #tpu.pipeline_mode<synchronous>, transform_indices = @transform_3, window_bounds = array<i64: 128, 2>}, {pipeline_mode = #tpu.pipeline_mode<synchronous>, transform_indices = @transform_4, window_bounds = array<i64: 1, 2>}, {transform_indices = @transform_5, window_bounds = array<i64: 8, 2>}]} {
    %c0 = arith.constant 0 : index
    %c0_0 = arith.constant 0 : index
    %0 = vector.load %arg1[%c0, %c0_0] : memref<8x4xbf16, #tpu.memory_space<vmem>>, vector<8x4xbf16>
    %c0_1 = arith.constant 0 : index
    %c0_2 = arith.constant 0 : index
    %1 = vector.load %arg2[%c0_1, %c0_2] : memref<4x128xbf16, #tpu.memory_space<vmem>>, vector<4x128xbf16>
    %cst = arith.constant dense<0.000000e+00> : vector<8x128xf32>
    %2 = tpu.matmul %0, %1, %cst {dimension_numbers = #tpu.dot_dimension_numbers<[1], [0], [0], [1], [0, 0, 1, 1], [], []>} : vector<8x4xbf16>, vector<4x128xbf16>, vector<8x128xf32> -> vector<8x128xf32>
    %c0_3 = arith.constant 0 : index
    %c0_4 = arith.constant 0 : index
    %3 = vector.load %arg3[%c0_3, %c0_4] : memref<1x128xf32, #tpu.memory_space<vmem>>, vector<1x128xf32>
    %4 = vector.broadcast %3 : vector<1x128xf32> to vector<8x128xf32>
    %5 = arith.addf %2, %4 : vector<8x128xf32>
    %cst_5 = arith.constant 0.000000e+00 : f32
    %6 = vector.broadcast %cst_5 : f32 to vector<8x128xf32>
    %7 = arith.maximumf %5, %6 : vector<8x128xf32>
    %8 = arith.truncf %7 : vector<8x128xf32> to vector<8x128xbf16>
    %c0_6 = arith.constant 0 : index
    %c0_7 = arith.constant 0 : index
    %9 = vector.load %arg4[%c0_6, %c0_7] : memref<128x2xbf16, #tpu.memory_space<vmem>>, vector<128x2xbf16>
    %cst_8 = arith.constant dense<0.000000e+00> : vector<8x2xf32>
    %10 = tpu.matmul %8, %9, %cst_8 {dimension_numbers = #tpu.dot_dimension_numbers<[1], [0], [0], [1], [0, 0, 1, 1], [], []>} : vector<8x128xbf16>, vector<128x2xbf16>, vector<8x2xf32> -> vector<8x2xf32>
    %c0_9 = arith.constant 0 : index
    %c0_10 = arith.constant 0 : index
    %11 = vector.load %arg5[%c0_9, %c0_10] : memref<1x2xf32, #tpu.memory_space<vmem>>, vector<1x2xf32>
    %12 = vector.broadcast %11 : vector<1x2xf32> to vector<8x2xf32>
    %13 = arith.addf %10, %12 : vector<8x2xf32>
    %c0_11 = arith.constant 0 : index
    %c0_12 = arith.constant 0 : index
    %14 = vector.load %arg6[%c0_11, %c0_12] : memref<8x2xf32, #tpu.memory_space<vmem>>, vector<8x2xf32>
    tpu.vector_store %arg6[%c0_11, %c0_12], %13 {strides = array<i32>} : memref<8x2xf32, #tpu.memory_space<vmem>>, vector<8x2xf32>,
    return
  }
  func.func @transform_0(%arg0: i32) -> (i32, i32) {
    %c0_i32 = arith.constant 0 : i32
    %c0_i32_0 = arith.constant 0 : i32
    return %arg0, %c0_i32 : i32, i32
  }
  func.func @transform_1(%arg0: i32) -> (i32, i32) {
    %c0_i32 = arith.constant 0 : i32
    %c0_i32_0 = arith.constant 0 : i32
    %c0_i32_1 = arith.constant 0 : i32
    return %c0_i32, %c0_i32_0 : i32, i32
  }
  func.func @transform_2(%arg0: i32) -> (i32, i32) {
    %c0_i32 = arith.constant 0 : i32
    %c0_i32_0 = arith.constant 0 : i32
    %c0_i32_1 = arith.constant 0 : i32
    return %c0_i32, %c0_i32_0 : i32, i32
  }
  func.func @transform_3(%arg0: i32) -> (i32, i32) {
    %c0_i32 = arith.constant 0 : i32
    %c0_i32_0 = arith.constant 0 : i32
    %c0_i32_1 = arith.constant 0 : i32
    return %c0_i32, %c0_i32_0 : i32, i32
  }
  func.func @transform_4(%arg0: i32) -> (i32, i32) {
    %c0_i32 = arith.constant 0 : i32
    %c0_i32_0 = arith.constant 0 : i32
    %c0_i32_1 = arith.constant 0 : i32
    return %c0_i32, %c0_i32_0 : i32, i32
  }
  func.func @transform_5(%arg0: i32) -> (i32, i32) {
    %c0_i32 = arith.constant 0 : i32
    %c0_i32_0 = arith.constant 0 : i32
    return %arg0, %c0_i32 : i32, i32
  }
}

</mosaic_0001>

<llo_original>
// kernel: pi_forward_pallas.1
$region0: #{pi_forward_pallas.1}
  #allocation0 [shape = 'u32[]', space=smem, size = 0x4, offset = 0x4, fixed_abs, tag = 'smem constant byte address 0x4 - core index']
  #allocation1 [shape = 'u32[144,128]{1,0:T(1,128)}', space=vmem, size = 0x12000, scoped, tag = 'internal scratch']
  %s0 = inlined_call_operand.vmem [shape: bf16[8,4], index: 0, kind: input, shape index: {}]
  %s1 = inlined_call_operand.vmem [shape: bf16[4,128], index: 1, kind: input, shape index: {}]
  %s2 = inlined_call_operand.vmem [shape: f32[1,128], index: 2, kind: input, shape index: {}]
  %s3 = inlined_call_operand.vmem [shape: bf16[128,2], index: 3, kind: input, shape index: {}]
  %s4 = inlined_call_operand.vmem [shape: f32[1,2], index: 4, kind: input, shape index: {}]
  %s5 = inlined_call_operand.vmem [shape: f32[8,2], index: 5, kind: output, shape index: {}]
  %s6 = sld [smem:[#allocation0]]
  $region30: #{pi_forward_pallas.1} parent=0
    _
  %s8 = ssub.s32 1, %s6
  %s9 = scalar_select 0, %s8, %s6
  // Predicated region
  $region2: #{pi_forward_pallas.1} parent=0 // pred_check
    _
  $region3: #{pi_forward_pallas.1} parent=0 // pred_check_branch
    %11 = sbr.rel (0) target = $region5
  $region4: #{pi_forward_pallas.1} parent=0 // pred_region
    _
  $region5: #{pi_forward_pallas.1} parent=0 // pred_fallthru
    _
  // Predicated region
  $region6: #{pi_forward_pallas.1} parent=0 // pred_check
    _
  $region7: #{pi_forward_pallas.1} parent=0 // pred_check_branch
    %13 = sbr.rel (0) target = $region9
  $region8: #{pi_forward_pallas.1} parent=0 // pred_region
    _
  $region9: #{pi_forward_pallas.1} parent=0 // pred_fallthru
    _
  // Predicated region
  $region10: #{pi_forward_pallas.1} parent=0 // pred_check
    _
  $region11: #{pi_forward_pallas.1} parent=0 // pred_check_branch
    %15 = sbr.rel (0) target = $region13
  $region12: #{pi_forward_pallas.1} parent=0 // pred_region
    _
  $region13: #{pi_forward_pallas.1} parent=0 // pred_fallthru
    _
  // Predicated region
  $region14: #{pi_forward_pallas.1} parent=0 // pred_check
    _
  $region15: #{pi_forward_pallas.1} parent=0 // pred_check_branch
    %17 = sbr.rel (0) target = $region17
  $region16: #{pi_forward_pallas.1} parent=0 // pred_region
    _
  $region17: #{pi_forward_pallas.1} parent=0 // pred_fallthru
    _
  // Predicated region
  $region18: #{pi_forward_pallas.1} parent=0 // pred_check
    _
  $region19: #{pi_forward_pallas.1} parent=0 // pred_check_branch
    %19 = sbr.rel (0) target = $region21
  $region20: #{pi_forward_pallas.1} parent=0 // pred_region
    _
  $region21: #{pi_forward_pallas.1} parent=0 // pred_fallthru
    _
  %v21 = vld [vmem:[%s0] sm:$0xf]
  %v22 = vld [vmem:[%s1] sm:$0x3]
  %v23 = vld [vmem:[%s2] sm:$0x1]
  %v25 = vlaneseq
  %v26 = vshrl.u32 %v25, 7
  %v27 = vsub.s32 0, %v26
  %v28 = vrot.slane %v23, %v27
  %vm30 = vcmask 31744
  %v32 = vsel %vm30, %v21, 0
  %vm34 = vcmask 1041408
  %v36 = vsel %vm34, %v22, 0
  %38 = vmatprep.subr.bf16.mxu0 0
  %39 = vmatpush1.bf16.msra.mxu0 %v36
  %40 = vmatprep.subr.bf16.mxu0 0
  %41 = vmatpush1.bf16.msra.mxu0 0
  %42 = vmatprep.subr.bf16.mxu0 0
  %43 = vmatpush1.bf16.msra.mxu0 0
  %44 = vmatprep.subr.bf16.mxu0 0
  %45 = vmatpush1.bf16.msra.mxu0 0
  %46 = vmatprep.subr.bf16.mxu0 0
  %47 = vmatpush1.bf16.msra.mxu0 0
  %48 = vmatprep.subr.bf16.mxu0 0
  %49 = vmatpush1.bf16.msra.mxu0 0
  %50 = vmatprep.subr.bf16.mxu0 0
  %51 = vmatpush1.bf16.msra.mxu0 0
  %52 = vmatprep.subr.bf16.mxu0 0
  %53 = vmatpush1.bf16.msra.mxu0 0
  %54 = vmatprep.subr.bf16.mxu0 0
  %55 = vmatpush1.bf16.msra.mxu0 0
  %56 = vmatprep.subr.bf16.mxu0 0
  %57 = vmatpush1.bf16.msra.mxu0 0
  %58 = vmatprep.subr.bf16.mxu0 0
  %59 = vmatpush1.bf16.msra.mxu0 0
  %60 = vmatprep.subr.bf16.mxu0 0
  %61 = vmatpush1.bf16.msra.mxu0 0
  %62 = vmatprep.subr.bf16.mxu0 0
  %63 = vmatpush1.bf16.msra.mxu0 0
  %64 = vmatprep.subr.bf16.mxu0 0
  %65 = vmatpush1.bf16.msra.mxu0 0
  %66 = vmatprep.subr.bf16.mxu0 0
  %67 = vmatpush1.bf16.msra.mxu0 0
  %68 = vmatprep.subr.bf16.mxu0 0
  %69 = vmatpush1.bf16.msra.mxu0 0
  %70 = vmatprep.mubr.bf16.mxu0 0
  %71 = vmatmul.mubr.bf16.gmra.mrb[0].mxu0 %v32
  %v72 = vpop.f32.mrb[0].mxu0
  %v73 = vadd.f32 %v28, %v72
  %v74 = vpop.f32.mrb[0].mxu0
  %v75 = vpop.f32.mrb[0].mxu0
  %v76 = vpop.f32.mrb[0].mxu0
  %77 = vdwg.mxu0
  %v78 = vmax.f32 %v73, 0.0
  %v79 = vpack.c.bf16 %v78, %v78
  %v80 = vld [vmem:[%s3] sm:$0xf]
  %v81 = vld [vmem:[%s3 + $0x4] sm:$0xf]
  %v82 = vld [vmem:[%s3 + $0x8] sm:$0xf]
  %v83 = vld [vmem:[%s3 + $0xc] sm:$0xf]
  %v84 = vld [vmem:[%s3 + $0x10] sm:$0xf]
  %v85 = vld [vmem:[%s3 + $0x14] sm:$0xf]
  %v86 = vld [vmem:[%s3 + $0x18] sm:$0xf]
  %v87 = vld [vmem:[%s3 + $0x1c] sm:$0xf]
  %v88 = vld [vmem:[%s3 + $0x20] sm:$0xf]
  %v89 = vld [vmem:[%s3 + $0x24] sm:$0xf]
  %v90 = vld [vmem:[%s3 + $0x28] sm:$0xf]
  %v91 = vld [vmem:[%s3 + $0x2c] sm:$0xf]
  %v92 = vld [vmem:[%s3 + $0x30] sm:$0xf]
  %v93 = vld [vmem:[%s3 + $0x34] sm:$0xf]
  %v94 = vld [vmem:[%s3 + $0x38] sm:$0xf]
  %v95 = vld [vmem:[%s3 + $0x3c] sm:$0xf]
  %v96 = vld [vmem:[%s4] sm:$0x1]
  %v98 = vlaneseq
  %v99 = vshrl.u32 %v98, 7
  %v100 = vsub.s32 0, %v99
  %v101 = vrot.slane %v96, %v100
  %v119 = vunpack.c.l.b16 %v80
  %v120 = vunpack.c.l.b16 %v81
  %v121 = vunpack.c.l.b16 %v82
  %v122 = vunpack.c.l.b16 %v83
  %v123 = vunpack.c.l.b16 %v84
  %v124 = vunpack.c.l.b16 %v85
  %v125 = vunpack.c.l.b16 %v86
  %v126 = vunpack.c.l.b16 %v87
  %v127 = vunpack.c.l.b16 %v88
  %v128 = vunpack.c.l.b16 %v89
  %v129 = vunpack.c.l.b16 %v90
  %v130 = vunpack.c.l.b16 %v91
  %v131 = vunpack.c.l.b16 %v92
  %v132 = vunpack.c.l.b16 %v93
  %v133 = vunpack.c.l.b16 %v94
  %v134 = vunpack.c.l.b16 %v95
  %v135 = vpack.c.b16 %v120, %v119
  %v136 = vpack.c.b16 %v122, %v121
  %v137 = vpack.c.b16 %v124, %v123
  %v138 = vpack.c.b16 %v126, %v125
  %v139 = vpack.c.b16 %v128, %v127
  %v140 = vpack.c.b16 %v130, %v129
  %v141 = vpack.c.b16 %v132, %v131
  %v142 = vpack.c.b16 %v134, %v133
  %151 = vmatprep.subr.bf16.mxu0 0
  %152 = vmatpush1.bf16.msra.mxu0 %v135
  %153 = vmatprep.subr.bf16.mxu0 0
  %154 = vmatpush1.bf16.msra.mxu0 %v136
  %155 = vmatprep.subr.bf16.mxu0 0
  %156 = vmatpush1.bf16.msra.mxu0 %v137
  %157 = vmatprep.subr.bf16.mxu0 0
  %158 = vmatpush1.bf16.msra.mxu0 %v138
  %159 = vmatprep.subr.bf16.mxu0 0
  %160 = vmatpush1.bf16.msra.mxu0 %v139
  %161 = vmatprep.subr.bf16.mxu0 0
  %162 = vmatpush1.bf16.msra.mxu0 %v140
  %163 = vmatprep.subr.bf16.mxu0 0
  %164 = vmatpush1.bf16.msra.mxu0 %v141
  %165 = vmatprep.subr.bf16.mxu0 0
  %166 = vmatpush1.bf16.msra.mxu0 %v142
  %167 = vmatprep.subr.bf16.mxu0 0
  %168 = vmatpush1.bf16.msra.mxu0 0
  %169 = vmatprep.subr.bf16.mxu0 0
  %170 = vmatpush1.bf16.msra.mxu0 0
  %171 = vmatprep.subr.bf16.mxu0 0
  %172 = vmatpush1.bf16.msra.mxu0 0
  %173 = vmatprep.subr.bf16.mxu0 0
  %174 = vmatpush1.bf16.msra.mxu0 0
  %175 = vmatprep.subr.bf16.mxu0 0
  %176 = vmatpush1.bf16.msra.mxu0 0
  %177 = vmatprep.subr.bf16.mxu0 0
  %178 = vmatpush1.bf16.msra.mxu0 0
  %179 = vmatprep.subr.bf16.mxu0 0
  %180 = vmatpush1.bf16.msra.mxu0 0
  %181 = vmatprep.subr.bf16.mxu0 0
  %182 = vmatpush1.bf16.msra.mxu0 0
  %183 = vmatprep.mubr.bf16.mxu0 0
  %184 = vmatmul.mubr.bf16.gmra.mrb[0].mxu0 %v79
  %v185 = vpop.f32.mrb[0].mxu0
  %v186 = vadd.f32 %v101, %v185
  %v187 = vpop.f32.mrb[0].mxu0
  %v188 = vpop.f32.mrb[0].mxu0
  %v189 = vpop.f32.mrb[0].mxu0
  %190 = vdwg.mxu0
  %vm191 = vcmask 15360
  %192 = vst.msk [vmem:[%s5] sm:$0xff] %vm191, %v186
  // Predicated region
  $region22: #{pi_forward_pallas.1} parent=0 // pred_check
    _
  $region23: #{pi_forward_pallas.1} parent=0 // pred_check_branch
    %194 = sbr.rel (0) target = $region25
  $region24: #{pi_forward_pallas.1} parent=0 // pred_region
    _
  $region25: #{pi_forward_pallas.1} parent=0 // pred_fallthru
    _
  // Predicated region
  $region26: #{pi_forward_pallas.1} parent=0 // pred_check
    _
  $region27: #{pi_forward_pallas.1} parent=0 // pred_check_branch
    %196 = sbr.rel (0) target = $region29
  $region28: #{pi_forward_pallas.1} parent=0 // pred_region
    _
  $region29: #{pi_forward_pallas.1} parent=0 // pred_fallthru
    _

</llo_original>
